<compile_context>
chip_gen: v7x
topology: tpu7x:2x2x1
jax: 0.10.0
libtpu: 0.0.40
codegen_flags: <defaults>
</compile_context>

<pallas_src>
import math
import functools
import numpy as np
import jax
import jax.numpy as jnp
from jax.experimental import pallas as pl
from jax.experimental.pallas import tpu as pltpu


# --------------------------- tiling / spec helpers --------------------------

def _pick_tile(dim, pref, align):
    """Largest multiple of `align` that divides `dim` and is <= pref, else full dim."""
    if dim <= pref:
        return dim
    t = (pref // align) * align
    while t >= align:
        if dim % t == 0:
            return t
        t -= align
    return dim


def _default_vmem_limit():
    # Explicit scoped-VMEM budget (defaults are 16-32 MiB per generation).
    # ~48 MiB is safe on v5e/v6e (128 MiB) and v7x (64 MiB); clamp to 3/4 of
    # whatever the local chip reports so the script also runs on smaller parts.
    try:
        cap = pltpu.get_tpu_info().vmem_capacity_bytes
        return int(min(48 * 1024 * 1024, cap * 3 // 4))
    except Exception:
        return None


_VMEM_LIMIT = _default_vmem_limit()


def _cparams(dimension_semantics):
    kw = dict(dimension_semantics=dimension_semantics)
    if _VMEM_LIMIT:
        kw["vmem_limit_bytes"] = _VMEM_LIMIT
    return pltpu.CompilerParams(**kw)


_BUFFERED_SINGLE = None


def _buffered_ok():
    """Probe whether pipeline_mode=pl.Buffered(1) is supported by this runtime."""
    global _BUFFERED_SINGLE
    if _BUFFERED_SINGLE is None:
        try:
            def _k(x_ref, o_ref):
                o_ref[...] = x_ref[...] + 1.0
            x = jnp.zeros((8, 128), jnp.float32)
            out = pl.pallas_call(
                _k, out_shape=jax.ShapeDtypeStruct((8, 128), jnp.float32),
                grid=(1,),
                in_specs=[pl.BlockSpec((8, 128), lambda i: (0, 0),
                                       pipeline_mode=pl.Buffered(1))],
                out_specs=pl.BlockSpec((8, 128), lambda i: (0, 0)))(x)
            jax.block_until_ready(out)
            _BUFFERED_SINGLE = True
        except Exception:
            _BUFFERED_SINGLE = False
    return _BUFFERED_SINGLE


def _const_spec(shape, index_map):
    """Grid-invariant block: fetched once; single-buffer it to halve its VMEM."""
    if _buffered_ok():
        return pl.BlockSpec(shape, index_map, pipeline_mode=pl.Buffered(1))
    return pl.BlockSpec(shape, index_map)


# ----------------------------- Pallas kernels -------------------------------

def _norm_qkv_kernel(x_ref, g_ref, w_ref, o_ref, xn_sc, *, eps):
    """Fused RMSNorm + QKV projection, column-tiled over the 3D output axis."""
    @pl.when(pl.program_id(1) == 0)
    def _():
        x = x_ref[...].astype(jnp.float32)
        ms = jnp.mean(x * x, axis=-1, keepdims=True)
        xn_sc[...] = ((x * jax.lax.rsqrt(ms + eps)) * g_ref[...]).astype(jnp.bfloat16)
    o_ref[...] = jnp.dot(xn_sc[...], w_ref[...],
                         preferred_element_type=jnp.float32).astype(jnp.bfloat16)


def pallas_norm_qkv(x2d, gamma, wqkv, eps):
    M, D = x2d.shape
    N3 = wqkv.shape[1]
    tm = _pick_tile(M, 512, 16)
    tn = _pick_tile(N3, 1536, 128)
    return pl.pallas_call(
        functools.partial(_norm_qkv_kernel, eps=eps),
        out_shape=jax.ShapeDtypeStruct((M, N3), jnp.bfloat16),
        grid=(M // tm, N3 // tn),
        in_specs=[pl.BlockSpec((tm, D), lambda i, j: (i, 0)),
                  _const_spec((1, D), lambda i, j: (0, 0)),
                  pl.BlockSpec((D, tn), lambda i, j: (0, j))],
        out_specs=pl.BlockSpec((tm, tn), lambda i, j: (i, j)),
        scratch_shapes=[pltpu.VMEM((tm, D), jnp.bfloat16)],
        compiler_params=_cparams(("parallel", "arbitrary")),
    )(x2d, gamma.reshape(1, D), wqkv)


def _attn_kernel(qkv_ref, h_ref, cos_ref, sin_ref, wo_ref, o_ref, *, n_heads, scale):
    """One batch element: RoPE + causal attention (all heads) + Wo + residual."""
    S = qkv_ref.shape[1]
    D = qkv_ref.shape[2] // 3
    hd = D // n_heads
    half = hd // 2

    qkv = qkv_ref[0]                         # (S, 3D) bf16
    cos = cos_ref[...]                       # (S, hd) f32  [cos | cos]
    sin = sin_ref[...]                       # (S, hd) f32  [-sin | +sin]

    row = jax.lax.broadcasted_iota(jnp.int32, (S, S), 0)
    col = jax.lax.broadcasted_iota(jnp.int32, (S, S), 1)
    causal = col <= row                      # in-kernel mask, no (S,S) HBM DMA

    def rope(x):                             # x: (S, hd) f32, split-half layout
        # swap halves (== pltpu.roll(x, hd//2) on HW; sign carried by `sin`)
        swapped = jnp.concatenate([x[:, half:], x[:, :half]], axis=1)
        return x * cos + swapped * sin

    # TODO(synk): for long S / many heads switch to a flash-style KV grid axis
    # with head groups so the per-head (S,S) scores stay VMEM-bounded.
    outs = []
    for hh in range(n_heads):
        a = hh * hd
        qh = rope(qkv[:, a:a + hd].astype(jnp.float32)).astype(jnp.bfloat16)
        kh = rope(qkv[:, D + a:D + a + hd].astype(jnp.float32)).astype(jnp.bfloat16)
        vh = qkv[:, 2 * D + a:2 * D + a + hd]
        s = jax.lax.dot_general(qh, kh, (((1,), (1,)), ((), ())),
                                preferred_element_type=jnp.float32) * scale
        s = jnp.where(causal, s, -jnp.inf)
        m = jnp.max(s, axis=-1, keepdims=True)
        p = jnp.exp(s - m)
        p = p * pl.reciprocal(jnp.sum(p, axis=-1, keepdims=True), approx=True)
        outs.append(jnp.dot(p.astype(jnp.bfloat16), vh,
                            preferred_element_type=jnp.float32))
    attn = jnp.concatenate(outs, axis=-1).astype(jnp.bfloat16)     # (S, D)
    o_ref[0] = h_ref[0] + jnp.dot(attn, wo_ref[...],
                                  preferred_element_type=jnp.float32)


def pallas_attention(qkv, h, cos, sin, wo, n_heads):
    """qkv: (B,S,3D) bf16, h: (B,S,D) f32 residual -> (B,S,D) f32 (h + attn@wo)."""
    B, S, D3 = qkv.shape
    D = D3 // 3
    hd = D // n_heads
    return pl.pallas_call(
        functools.partial(_attn_kernel, n_heads=n_heads, scale=1.0 / math.sqrt(hd)),
        out_shape=jax.ShapeDtypeStruct((B, S, D), jnp.float32),
        grid=(B,),
        in_specs=[pl.BlockSpec((1, S, D3), lambda b: (b, 0, 0)),
                  pl.BlockSpec((1, S, D), lambda b: (b, 0, 0)),
                  _const_spec((S, hd), lambda b: (0, 0)),
                  _const_spec((S, hd), lambda b: (0, 0)),
                  _const_spec((D, D), lambda b: (0, 0))],
        out_specs=pl.BlockSpec((1, S, D), lambda b: (b, 0, 0)),
        compiler_params=_cparams(("parallel",)),
    )(qkv, h, cos, sin, wo)


def _ffn_res_kernel(h_ref, g_ref, w1_ref, w3_ref, w2_ref, out_ref, xn_sc, acc_sc, *, eps):
    """Fused RMSNorm + SwiGLU FFN + residual, grid-tiled over the hidden dim."""
    j = pl.program_id(1)
    nj = pl.num_programs(1)

    @pl.when(j == 0)
    def _():
        h = h_ref[...].astype(jnp.float32)
        ms = jnp.mean(h * h, axis=-1, keepdims=True)
        xn_sc[...] = ((h * jax.lax.rsqrt(ms + eps)) * g_ref[...]).astype(jnp.bfloat16)
        acc_sc[...] = h                      # seed accumulator with the residual

    a1 = jnp.dot(xn_sc[...], w1_ref[...], preferred_element_type=jnp.float32)
    a3 = jnp.dot(xn_sc[...], w3_ref[...], preferred_element_type=jnp.float32)
    g = (a1 * jax.nn.sigmoid(a1)) * a3
    acc_sc[...] += jnp.dot(g.astype(jnp.bfloat16), w2_ref[...],
                           preferred_element_type=jnp.float32)

    @pl.when(j == nj - 1)
    def _():
        out_ref[...] = acc_sc[...]


def pallas_ffn_residual(h2d, gamma, w1, w3, w2, eps):
    M, D = h2d.shape
    Hd = w1.shape[1]
    tm = _pick_tile(M, 512, 16)
    th = _pick_tile(Hd, 1024, 128)
    return pl.pallas_call(
        functools.partial(_ffn_res_kernel, eps=eps),
        out_shape=jax.ShapeDtypeStruct((M, D), jnp.float32),
        grid=(M // tm, Hd // th),
        in_specs=[pl.BlockSpec((tm, D), lambda i, j: (i, 0)),
                  _const_spec((1, D), lambda i, j: (0, 0)),
                  pl.BlockSpec((D, th), lambda i, j: (0, j)),
                  pl.BlockSpec((D, th), lambda i, j: (0, j)),
                  pl.BlockSpec((th, D), lambda i, j: (j, 0))],
        out_specs=pl.BlockSpec((tm, D), lambda i, j: (i, 0)),
        scratch_shapes=[pltpu.VMEM((tm, D), jnp.bfloat16),
                        pltpu.VMEM((tm, D), jnp.float32)],
        compiler_params=_cparams(("parallel", "arbitrary")),
    )(h2d, gamma.reshape(1, D), w1, w3, w2)


def _projector_kernel(x_ref, w1_ref, b1_ref, w2_ref, b2_ref, o_ref, *, out_scale):
    h = jnp.dot(x_ref[...].astype(jnp.bfloat16), w1_ref[...],
                preferred_element_type=jnp.float32) + b1_ref[...]
    h = h * jax.nn.sigmoid(h)                       # silu
    o = jnp.dot(h.astype(jnp.bfloat16), w2_ref[...],
                preferred_element_type=jnp.float32) + b2_ref[...]
    o_ref[...] = (o * out_scale).astype(jnp.bfloat16)   # *0.01 folded in-kernel


def pallas_projector(x2d, w1, b1, w2, b2, out_scale):
    M, Fin = x2d.shape
    Hd = w1.shape[1]
    Fout = w2.shape[1]
    tm = _pick_tile(M, 512, 16)
    return pl.pallas_call(
        functools.partial(_projector_kernel, out_scale=out_scale),
        out_shape=jax.ShapeDtypeStruct((M, Fout), jnp.bfloat16),
        grid=(M // tm,),
        in_specs=[pl.BlockSpec((tm, Fin), lambda i: (i, 0)),
                  _const_spec((Fin, Hd), lambda i: (0, 0)),
                  _const_spec((1, Hd), lambda i: (0, 0)),
                  _const_spec((Hd, Fout), lambda i: (0, 0)),
                  _const_spec((1, Fout), lambda i: (0, 0))],
        out_specs=pl.BlockSpec((tm, Fout), lambda i: (i, 0)),
        compiler_params=_cparams(("parallel",)),
    )(x2d, w1, b1.reshape(1, Hd), w2, b2.reshape(1, Fout))


def _norm_lmhead_ce_kernel(h_ref, g_ref, w_ref, lbl_ref,
                           loss_ref, cnt_ref, pred_ref,
                           xn_sc, m_sc, l_sc, tgt_sc, bv_sc, bi_sc, *, tv, eps):
    """Fused final RMSNorm + LM head + CrossEntropy(ignore_index=0) + argmax.

    Grid = (row_tiles [parallel], vocab_tiles [arbitrary]); online softmax over
    vocab tiles so the (N, V) logits never hit HBM.  Loss/count are emitted as
    per-row-tile partials (summed in the wrapper) -> no cross-core race."""
    j = pl.program_id(1)
    nj = pl.num_programs(1)

    @pl.when(j == 0)
    def _():
        h = h_ref[...].astype(jnp.float32)
        ms = jnp.mean(h * h, axis=-1, keepdims=True)
        xn_sc[...] = ((h * jax.lax.rsqrt(ms + eps)) * g_ref[...]).astype(jnp.bfloat16)
        m_sc[...] = jnp.full_like(m_sc, -jnp.inf)
        l_sc[...] = jnp.zeros_like(l_sc)
        tgt_sc[...] = jnp.zeros_like(tgt_sc)
        bv_sc[...] = jnp.full_like(bv_sc, -jnp.inf)
        bi_sc[...] = jnp.zeros_like(bi_sc)

    logits = jnp.dot(xn_sc[...], w_ref[...], preferred_element_type=jnp.float32)
    lbl = lbl_ref[...]                                            # (tm, 1) int32
    col = jax.lax.broadcasted_iota(jnp.int32, logits.shape, 1) + j * tv

    # online log-sum-exp
    tile_max = jnp.max(logits, axis=-1, keepdims=True)
    m_new = jnp.maximum(m_sc[...], tile_max)
    l_sc[...] = l_sc[...] * jnp.exp(m_sc[...] - m_new) + jnp.sum(
        jnp.exp(logits - m_new), axis=-1, keepdims=True)
    m_sc[...] = m_new
    # target logit (only the tile containing the label contributes)
    tgt_sc[...] += jnp.sum(jnp.where(col == lbl, logits, 0.0), axis=-1, keepdims=True)
    # running argmax (first occurrence wins)
    tile_arg = jnp.argmax(logits, axis=-1, keepdims=True).astype(jnp.int32) + j * tv
    upd = tile_max > bv_sc[...]
    bi_sc[...] = jnp.where(upd, tile_arg, bi_sc[...])
    bv_sc[...] = jnp.where(upd, tile_max, bv_sc[...])

    @pl.when(j == nj - 1)
    def _():
        nll = (m_sc[...] + jnp.log(l_sc[...])) - tgt_sc[...]      # (tm, 1)
        valid = (lbl != 0).astype(jnp.float32)                    # ignore_index=0
        loss_ref[...] = jnp.sum(nll * valid, axis=0, keepdims=True)
        cnt_ref[...] = jnp.sum(valid, axis=0, keepdims=True)
        pred_ref[...] = bi_sc[...]


def pallas_norm_lmhead_ce(h2d, gamma, w, labels, eps):
    """h2d: (N, D) f32, w: (D, V) bf16, labels: (N,) int -> (mean loss, preds)."""
    N, D = h2d.shape
    V = w.shape[1]
    tm = _pick_tile(N, 256, 16)
    tv = _pick_tile(V, 1024, 128)
    ni = N // tm
    loss_p, cnt_p, preds = pl.pallas_call(
        functools.partial(_norm_lmhead_ce_kernel, tv=tv, eps=eps),
        out_shape=(jax.ShapeDtypeStruct((ni, 1), jnp.float32),
                   jax.ShapeDtypeStruct((ni, 1), jnp.float32),
                   jax.ShapeDtypeStruct((N, 1), jnp.int32)),
        grid=(ni, V // tv),
        in_specs=[pl.BlockSpec((tm, D), lambda i, j: (i, 0)),
                  _const_spec((1, D), lambda i, j: (0, 0)),
                  pl.BlockSpec((D, tv), lambda i, j: (0, j)),
                  pl.BlockSpec((tm, 1), lambda i, j: (i, 0))],
        out_specs=(pl.BlockSpec((1, 1), lambda i, j: (i, 0)),
                   pl.BlockSpec((1, 1), lambda i, j: (i, 0)),
                   pl.BlockSpec((tm, 1), lambda i, j: (i, 0))),
        scratch_shapes=[pltpu.VMEM((tm, D), jnp.bfloat16),   # normalized rows
                        pltpu.VMEM((tm, 1), jnp.float32),    # running max
                        pltpu.VMEM((tm, 1), jnp.float32),    # running sum-exp
                        pltpu.VMEM((tm, 1), jnp.float32),    # target logit
                        pltpu.VMEM((tm, 1), jnp.float32),    # best value
                        pltpu.VMEM((tm, 1), jnp.int32)],     # best index
        compiler_params=_cparams(("parallel", "arbitrary")),
    )(h2d, gamma.reshape(1, D), w, labels.reshape(N, 1).astype(jnp.int32))
    loss = jnp.sum(loss_p) / jnp.maximum(jnp.sum(cnt_p), 1.0)   # guard: all ignored
    return loss, preds[:, 0]


# ----------------------------- host-side helpers -----------------------------

def _deinterleave_heads(w, n_heads):
    """Permute output features of a (Din, H*hd) projection so that, per head, the
    interleaved RoPE pairs (2i, 2i+1) become the split-half layout (i, i+hd/2).
    q and k get the same permutation, so attention scores are unchanged; this is
    what lets the kernel use a sign-agnostic rotate-by-hd/2 instead of the
    interleaved reshape(..., -1, 2) + stack relayout."""
    d_in, d_out = w.shape
    hd = d_out // n_heads
    w = w.reshape(d_in, n_heads, hd // 2, 2)
    w = jnp.concatenate([w[..., 0], w[..., 1]], axis=-1)     # (Din, H, hd)
    return w.reshape(d_in, d_out)


def precompute_rope_tables(hd, end, theta=10000.0):
    """Split-half RoPE tables matching the de-interleaved q/k feature layout."""
    half = hd // 2
    freqs = 1.0 / (theta ** (np.arange(0, hd, 2)[:half].astype(np.float32) / hd))
    ang = np.outer(np.arange(end, dtype=np.float32), freqs)   # (end, hd/2)
    cos = np.concatenate([np.cos(ang), np.cos(ang)], axis=1)  # (end, hd)
    sin = np.concatenate([-np.sin(ang), np.sin(ang)], axis=1)
    return jnp.asarray(cos), jnp.asarray(sin)


# ----------------------------- JAX glue --------------------------------------

def transformer_block(h, lp, rope_cos, rope_sin, n_heads, eps):
    B, S, D = h.shape
    M = B * S
    # fused RMSNorm + QKV projection -> (M, 3D) bf16 (one read of h)
    qkv = pallas_norm_qkv(h.reshape(M, D), lp["attn_norm"], lp["wqkv"], eps)
    # fused RoPE + causal attention + Wo + residual (QKV sliced in-kernel)
    h = pallas_attention(qkv.reshape(B, S, 3 * D), h, rope_cos, rope_sin,
                         lp["wo"], n_heads)
    # fused RMSNorm + SwiGLU FFN + residual (hidden dim grid-tiled)
    h = pallas_ffn_residual(h.reshape(M, D), lp["ffn_norm"], lp["w1"], lp["w3"],
                            lp["w2"], eps).reshape(B, S, D)
    return h


def transformer_forward(params, cfg, examples, labels, backbone_feats, seqlen):
    """seqlen is a host-static int (padded/bucketed in production)."""
    B = examples.shape[0]
    D = cfg["dim"]

    # Adapter / projector path: the reference module computes it, but the
    # provided TransformerBlock signature never consumes it.
    # TODO(synk): scGPT backbone (`self.backbone._encode`) and the adapter
    # injection into the layers are external / signature-mismatched; not translated.
    img = pallas_projector(backbone_feats.reshape(-1, backbone_feats.shape[-1]),
                           params["proj_w1"], params["proj_b1"],
                           params["proj_w2"], params["proj_b2"], 0.01)
    _image_embeds = img.reshape(B, -1, D)   # unused downstream in this spec

    # token embeddings + truncation to seqlen
    h = jnp.take(params["tok_emb"], examples, axis=0)[:, :seqlen].astype(jnp.float32)
    rope_cos = params["rope_cos"][:seqlen]
    rope_sin = params["rope_sin"][:seqlen]

    for lp in params["layers"]:
        h = transformer_block(h, lp, rope_cos, rope_sin, cfg["n_heads"],
                              cfg["norm_eps"])
        # TODO(synk): cumulative_attention_means bookkeeping uses `h1`, which the
        # provided TransformerBlock does not return; omitted.

    # final RMSNorm is fused into the LM-head/CE kernel (only the shifted rows
    # 0..seqlen-2 feed the loss, matching output[:, :-1] in the reference).
    shift_h = h[:, :-1, :].reshape(-1, D)
    labels_t = labels[:, :seqlen]
    shift_labels = labels_t[:, 1:].reshape(-1)
    c_loss, preds = pallas_norm_lmhead_ce(shift_h, params["norm_w"],
                                          params["out_w"], shift_labels,
                                          cfg["norm_eps"])
    return c_loss, preds, shift_labels


# ----------------------------- main -------------------------------------------

if __name__ == "__main__":
    # Small, lane-dense demo config (D=128, hidden=384, V=256, hd=32).
    cfg = dict(dim=128, n_layers=2, n_heads=4, vocab=256, multiple_of=128,
               norm_eps=1e-5, hidden_proj=128, emb=8, max_seq_len=16,
               proj_in=512)
    D, V, NL, H = cfg["dim"], cfg["vocab"], cfg["n_layers"], cfg["n_heads"]
    hd = D // H
    hidden = 4 * D
    hidden = int(2 * hidden / 3)
    hidden = cfg["multiple_of"] * ((hidden + cfg["multiple_of"] - 1) // cfg["multiple_of"])

    key = jax.random.PRNGKey(0)

    def nrm(k, shape, scale=0.02):
        return (scale * jax.random.normal(k, shape)).astype(jnp.float32)

    keys = jax.random.split(key, 8 + NL)
    rope_cos, rope_sin = precompute_rope_tables(hd, cfg["max_seq_len"] * 2)
    params = {
        "tok_emb": nrm(keys[0], (V, D), 0.02),
        "norm_w": jnp.ones((D,), jnp.float32),
        "out_w": nrm(keys[1], (D, V)).astype(jnp.bfloat16),
        "proj_w1": nrm(keys[2], (cfg["proj_in"], cfg["hidden_proj"])).astype(jnp.bfloat16),
        "proj_b1": jnp.zeros((cfg["hidden_proj"],), jnp.float32),
        "proj_w2": nrm(keys[3], (cfg["hidden_proj"], D)).astype(jnp.bfloat16),
        "proj_b2": jnp.zeros((D,), jnp.float32),
        "rope_cos": rope_cos,
        "rope_sin": rope_sin,
        "layers": [],
    }

    for li in range(NL):
        lk = jax.random.split(keys[8 + li], 7)
        wq, wk, wv = nrm(lk[0], (D, D)), nrm(lk[1], (D, D)), nrm(lk[2], (D, D))
        # de-interleave q/k output features per head -> split-half RoPE layout
        wq = _deinterleave_heads(wq, H)
        wk = _deinterleave_heads(wk, H)
        params["layers"].append({
            "attn_norm": jnp.ones((D,), jnp.float32),
            "ffn_norm": jnp.ones((D,), jnp.float32),
            "wqkv": jnp.concatenate([wq, wk, wv], axis=1).astype(jnp.bfloat16),
            "wo": nrm(lk[3], (D, D)).astype(jnp.bfloat16),
            "w1": nrm(lk[4], (D, hidden)).astype(jnp.bfloat16),
            "w3": nrm(lk[5], (D, hidden)).astype(jnp.bfloat16),
            "w2": nrm(lk[6], (hidden, D)).astype(jnp.bfloat16),
        })

    # deterministic inputs (host numpy copies so we can write padding)
    B, S_total = 2, 10
    ek, lk2, bk = jax.random.split(jax.random.PRNGKey(1), 3)
    examples = np.array(jax.random.randint(ek, (B, S_total), 1, V), dtype=np.int32)
    examples[0, 8:] = 0   # padding -> seqlen = 8
    examples[1, 6:] = 0
    labels = np.array(jax.random.randint(lk2, (B, S_total), 1, V), dtype=np.int32)
    labels[examples == 0] = 0  # ignored positions
    # seqlen = max nonzero position + 1 (host-static; bucketed in production)
    seqlen = int((examples > 0).nonzero()[1].max()) + 1

    examples_j = jnp.asarray(examples)
    labels_j = jnp.asarray(labels)
    backbone_feats = (0.1 * jax.random.normal(bk, (B, 4, cfg["proj_in"]))).astype(jnp.float32)

    loss, preds, shift_labels = transformer_forward(
        params, cfg, examples_j, labels_j, backbone_feats, seqlen)
    jax.block_until_ready(loss)
    jax.block_until_ready(preds)
    assert np.isfinite(float(loss))
    print("KERNEL_OK")
</pallas_src>

<mosaic_0001>
module attributes {stable_mosaic.version = 11 : i64} {
  func.func @_k(%arg0: i32, %arg1: memref<8x128xf32, #tpu.memory_space<vmem>>, %arg2: memref<8x128xf32, #tpu.memory_space<vmem>>) attributes {dimension_semantics = [#tpu.dimension_semantics<arbitrary>], iteration_bounds = array<i64: 1>, scalar_prefetch = 0 : i64, scratch_operands = 0 : i64, tpu.core_type = #tpu.core_type<tc>, window_params = [{pipeline_mode = #tpu.pipeline_mode<synchronous>, transform_indices = @transform_0, window_bounds = array<i64: 8, 128>}, {pipeline_mode = #tpu.pipeline_mode<synchronous>, transform_indices = @transform_1, window_bounds = array<i64: 8, 128>}]} {
    %c0 = arith.constant 0 : index
    %c0_0 = arith.constant 0 : index
    %0 = vector.load %arg1[%c0, %c0_0] : memref<8x128xf32, #tpu.memory_space<vmem>>, vector<8x128xf32>
    %cst = arith.constant 1.000000e+00 : f32
    %1 = vector.broadcast %cst : f32 to vector<8x128xf32>
    %2 = arith.addf %0, %1 : vector<8x128xf32>
    %c0_1 = arith.constant 0 : index
    %c0_2 = arith.constant 0 : index
    %3 = vector.load %arg2[%c0_1, %c0_2] : memref<8x128xf32, #tpu.memory_space<vmem>>, vector<8x128xf32>
    tpu.vector_store %arg2[%c0_1, %c0_2], %2 {strides = array<i32>} : memref<8x128xf32, #tpu.memory_space<vmem>>, vector<8x128xf32>,
    return
  }
  func.func @transform_0(%arg0: i32) -> (i32, i32) {
    %c0_i32 = arith.constant 0 : i32
    %c0_i32_0 = arith.constant 0 : i32
    %c0_i32_1 = arith.constant 0 : i32
    return %c0_i32, %c0_i32_0 : i32, i32
  }
  func.func @transform_1(%arg0: i32) -> (i32, i32) {
    %c0_i32 = arith.constant 0 : i32
    %c0_i32_0 = arith.constant 0 : i32
    %c0_i32_1 = arith.constant 0 : i32
    return %c0_i32, %c0_i32_0 : i32, i32
  }
}

module attributes {stable_mosaic.version = 11 : i64} {
  func.func @_projector_kernel(%arg0: i32, %arg1: memref<8x512xf32, #tpu.memory_space<vmem>>, %arg2: memref<512x128xbf16, #tpu.memory_space<vmem>>, %arg3: memref<1x128xf32, #tpu.memory_space<vmem>>, %arg4: memref<128x128xbf16, #tpu.memory_space<vmem>>, %arg5: memref<1x128xf32, #tpu.memory_space<vmem>>, %arg6: memref<8x128xbf16, #tpu.memory_space<vmem>>) attributes {dimension_semantics = [#tpu.dimension_semantics<parallel>], iteration_bounds = array<i64: 1>, scalar_prefetch = 0 : i64, scratch_operands = 0 : i64, tpu.core_type = #tpu.core_type<tc>, window_params = [{transform_indices = @transform_0, window_bounds = array<i64: 8, 512>}, {pipeline_mode = #tpu.pipeline_mode<synchronous>, transform_indices = @transform_1, window_bounds = array<i64: 512, 128>}, {pipeline_mode = #tpu.pipeline_mode<synchronous>, transform_indices = @transform_2, window_bounds = array<i64: 1, 128>}, {pipeline_mode = #tpu.pipeline_mode<synchronous>, transform_indices = @transform_3, window_bounds = array<i64: 128, 128>}, {pipeline_mode = #tpu.pipeline_mode<synchronous>, transform_indices = @transform_4, window_bounds = array<i64: 1, 128>}, {transform_indices = @transform_5, window_bounds = array<i64: 8, 128>}]} {
    %c0 = arith.constant 0 : index
    %c0_0 = arith.constant 0 : index
    %0 = vector.load %arg1[%c0, %c0_0] : memref<8x512xf32, #tpu.memory_space<vmem>>, vector<8x512xf32>
    %1 = arith.truncf %0 : vector<8x512xf32> to vector<8x512xbf16>
    %c0_1 = arith.constant 0 : index
    %c0_2 = arith.constant 0 : index
    %2 = vector.load %arg2[%c0_1, %c0_2] : memref<512x128xbf16, #tpu.memory_space<vmem>>, vector<512x128xbf16>
    %cst = arith.constant dense<0.000000e+00> : vector<8x128xf32>
    %3 = tpu.matmul %1, %2, %cst {dimension_numbers = #tpu.dot_dimension_numbers<[1], [0], [0], [1], [0, 0, 1, 1], [], []>} : vector<8x512xbf16>, vector<512x128xbf16>, vector<8x128xf32> -> vector<8x128xf32>
    %c0_3 = arith.constant 0 : index
    %c0_4 = arith.constant 0 : index
    %4 = vector.load %arg3[%c0_3, %c0_4] : memref<1x128xf32, #tpu.memory_space<vmem>>, vector<1x128xf32>
    %5 = vector.broadcast %4 : vector<1x128xf32> to vector<8x128xf32>
    %6 = arith.addf %3, %5 : vector<8x128xf32>
    %7 = arith.negf %6 : vector<8x128xf32>
    %8 = math.exp %7 : vector<8x128xf32>
    %cst_5 = arith.constant 1.000000e+00 : f32
    %9 = vector.broadcast %cst_5 : f32 to vector<8x128xf32>
    %10 = arith.addf %9, %8 : vector<8x128xf32>
    %11 = arith.divf %9, %10 : vector<8x128xf32>
    %12 = arith.mulf %6, %11 : vector<8x128xf32>
    %13 = arith.truncf %12 : vector<8x128xf32> to vector<8x128xbf16>
    %c0_6 = arith.constant 0 : index
    %c0_7 = arith.constant 0 : index
    %14 = vector.load %arg4[%c0_6, %c0_7] : memref<128x128xbf16, #tpu.memory_space<vmem>>, vector<128x128xbf16>
    %cst_8 = arith.constant dense<0.000000e+00> : vector<8x128xf32>
    %15 = tpu.matmul %13, %14, %cst_8 {dimension_numbers = #tpu.dot_dimension_numbers<[1], [0], [0], [1], [0, 0, 1, 1], [], []>} : vector<8x128xbf16>, vector<128x128xbf16>, vector<8x128xf32> -> vector<8x128xf32>
    %c0_9 = arith.constant 0 : index
    %c0_10 = arith.constant 0 : index
    %16 = vector.load %arg5[%c0_9, %c0_10] : memref<1x128xf32, #tpu.memory_space<vmem>>, vector<1x128xf32>
    %17 = vector.broadcast %16 : vector<1x128xf32> to vector<8x128xf32>
    %18 = arith.addf %15, %17 : vector<8x128xf32>
    %cst_11 = arith.constant 0.00999999977 : f32
    %19 = vector.broadcast %cst_11 : f32 to vector<8x128xf32>
    %20 = arith.mulf %18, %19 : vector<8x128xf32>
    %21 = arith.truncf %20 : vector<8x128xf32> to vector<8x128xbf16>
    %c0_12 = arith.constant 0 : index
    %c0_13 = arith.constant 0 : index
    %22 = vector.load %arg6[%c0_12, %c0_13] : memref<8x128xbf16, #tpu.memory_space<vmem>>, vector<8x128xbf16>
    tpu.vector_store %arg6[%c0_12, %c0_13], %21 {strides = array<i32>} : memref<8x128xbf16, #tpu.memory_space<vmem>>, vector<8x128xbf16>,
    return
  }
  func.func @transform_0(%arg0: i32) -> (i32, i32) {
    %c0_i32 = arith.constant 0 : i32
    %c0_i32_0 = arith.constant 0 : i32
    return %arg0, %c0_i32 : i32, i32
  }
  func.func @transform_1(%arg0: i32) -> (i32, i32) {
    %c0_i32 = arith.constant 0 : i32
    %c0_i32_0 = arith.constant 0 : i32
    %c0_i32_1 = arith.constant 0 : i32
    return %c0_i32, %c0_i32_0 : i32, i32
  }
  func.func @transform_2(%arg0: i32) -> (i32, i32) {
    %c0_i32 = arith.constant 0 : i32
    %c0_i32_0 = arith.constant 0 : i32
    %c0_i32_1 = arith.constant 0 : i32
    return %c0_i32, %c0_i32_0 : i32, i32
  }
  func.func @transform_3(%arg0: i32) -> (i32, i32) {
    %c0_i32 = arith.constant 0 : i32
    %c0_i32_0 = arith.constant 0 : i32
    %c0_i32_1 = arith.constant 0 : i32
    return %c0_i32, %c0_i32_0 : i32, i32
  }
  func.func @transform_4(%arg0: i32) -> (i32, i32) {
    %c0_i32 = arith.constant 0 : i32
    %c0_i32_0 = arith.constant 0 : i32
    %c0_i32_1 = arith.constant 0 : i32
    return %c0_i32, %c0_i32_0 : i32, i32
  }
  func.func @transform_5(%arg0: i32) -> (i32, i32) {
    %c0_i32 = arith.constant 0 : i32
    %c0_i32_0 = arith.constant 0 : i32
    return %arg0, %c0_i32 : i32, i32
  }
}

</mosaic_0001>

<llo_original>
// kernel: tpu_custom_call.1
$region0: #{tpu_custom_call.1}
  #allocation0 [shape = 'u32[]', space=smem, size = 0x4, offset = 0x4, fixed_abs, tag = 'smem constant byte address 0x4 - core index']
  #allocation1 [shape = 'u32[144,128]{1,0:T(1,128)}', space=vmem, size = 0x12000, scoped, tag = 'internal scratch']
  %s0 = inlined_call_operand.hbm [shape: f32[8,128], index: 0, kind: input, shape index: {}]
  %s1 = inlined_call_operand.hbm [shape: f32[8,128], index: 1, kind: output, shape index: {}]
  %s2 = sld [smem:[#allocation0]]
  $region18: #{tpu_custom_call.1} parent=0
    _
  %s4 = ssub.s32 1, %s2
  %s5 = scalar_select 0, %s4, %s2
  $region1: #{tpu_custom_call.1} parent=0
    #allocation2 [shape = 'u8[4096]{0}', space=vmem, size = 0x1000, scoped, tag = 'input window, operand 0, single buffered']
    #allocation3 [shape = 's32[1]{0}', space=sflag, size = 0x4, scoped, tag = 'scoped memory for tpu_custom_call.1']
    #allocation4 [shape = 's32[1]{0}', space=sflag, size = 0x4, scoped, tag = 'scoped memory for tpu_custom_call.1']
    #allocation5 [shape = 'u8[4096]{0}', space=vmem, size = 0x1000, scoped, tag = 'output window, operand 0, single buffered']
    %6 = vsyncpa [#allocation3], 0
    %7 = vsyncpa [#allocation4], 0
    // Predicated region
    $region2: #{tpu_custom_call.1} parent=1 // pred_check
      _
    $region3: #{tpu_custom_call.1} parent=1 // pred_check_branch
      %9 = sbr.rel (0) target = $region5
    $region4: #{tpu_custom_call.1} parent=1 // pred_region
      %s11 = ssub.s32 128, 128
      %12 = vsyncadd [#allocation3], %s11
      %s14 = sshll.u32 [#allocation2], 4
      %s15 = int_to_ptr.vmem [resolvable:$true] %s14
      %17 = dma.hbm_to_vmem [thread:$0]  %s0, 128, %s15, [#allocation3]
    $region5: #{tpu_custom_call.1} parent=1 // pred_fallthru
      _
    // Predicated region
    $region6: #{tpu_custom_call.1} parent=1 // pred_check
      _
    $region7: #{tpu_custom_call.1} parent=1 // pred_check_branch
      %19 = sbr.rel (0) target = $region9
    $region8: #{tpu_custom_call.1} parent=1 // pred_region
      %20 = dma.done [#allocation3], 128
    $region9: #{tpu_custom_call.1} parent=1 // pred_fallthru
      _
    %v21 = vld [vmem:[#allocation2] sm:$0xff]
    %v22 = vadd.f32 %v21, 1.0
    %23 = vst [vmem:[#allocation5] sm:$0xff] %v22
    // Predicated region
    $region10: #{tpu_custom_call.1} parent=1 // pred_check
      _
    $region11: #{tpu_custom_call.1} parent=1 // pred_check_branch
      %25 = sbr.rel (0) target = $region13
    $region12: #{tpu_custom_call.1} parent=1 // pred_region
      %s27 = ssub.s32 128, 128
      %28 = vsyncadd [#allocation4], %s27
      %s30 = sshll.u32 [#allocation5], 4
      %s31 = int_to_ptr.vmem [resolvable:$true] %s30
      %33 = dma.vmem_to_hbm [thread:$0]  %s31, 128, %s1, [#allocation4]
    $region13: #{tpu_custom_call.1} parent=1 // pred_fallthru
      _
    // Predicated region
    $region14: #{tpu_custom_call.1} parent=1 // pred_check
      _
    $region15: #{tpu_custom_call.1} parent=1 // pred_check_branch
      %35 = sbr.rel (0) target = $region17
    $region16: #{tpu_custom_call.1} parent=1 // pred_region
      %36 = dma.done [#allocation4], 128
    $region17: #{tpu_custom_call.1} parent=1 // pred_fallthru
      _
    %37 = vsyncpa [#allocation3], 1
    %38 = vsyncpa [#allocation4], 1

// kernel: tpu_custom_call.1
$region0: #{tpu_custom_call.1}
  #allocation0 [shape = 'u32[]', space=smem, size = 0x4, offset = 0x4, fixed_abs, tag = 'smem constant byte address 0x4 - core index']
  #allocation1 [shape = 'u32[144,128]{1,0:T(1,128)}', space=vmem, size = 0x12000, scoped, tag = 'internal scratch']
  %s0 = inlined_call_operand.hbm [shape: f32[8,512], index: 0, kind: input, shape index: {}]
  %s1 = inlined_call_operand.hbm [shape: bf16[512,128], index: 1, kind: input, shape index: {}]
  %s2 = inlined_call_operand.vmem [shape: f32[1,128], index: 2, kind: input, shape index: {}]
  %s3 = inlined_call_operand.hbm [shape: bf16[128,128], index: 3, kind: input, shape index: {}]
  %s4 = inlined_call_operand.vmem [shape: f32[1,128], index: 4, kind: input, shape index: {}]
  %s5 = inlined_call_operand.hbm [shape: bf16[8,128], index: 5, kind: output, shape index: {}]
  %s6 = sld [smem:[#allocation0]]
  $region42: #{tpu_custom_call.1} parent=0
    _
  %s8 = ssub.s32 1, %s6
  %s9 = scalar_select 0, %s8, %s6
  $region1: #{tpu_custom_call.1} parent=0
    #allocation2 [shape = 'u8[16384]{0}', space=vmem, size = 0x4000, scoped, tag = 'input window, operand 0, single buffered']
    #allocation3 [shape = 's32[1]{0}', space=sflag, size = 0x4, scoped, tag = 'scoped memory for tpu_custom_call.1']
    #allocation4 [shape = 's32[1]{0}', space=sflag, size = 0x4, scoped, tag = 'scoped memory for tpu_custom_call.1']
    #allocation5 [shape = 'u8[131072]{0}', space=vmem, size = 0x20000, scoped, tag = 'input window, operand 1, single buffered']
    #allocation6 [shape = 's32[1]{0}', space=sflag, size = 0x4, scoped, tag = 'scoped memory for tpu_custom_call.1']
    #allocation7 [shape = 'u8[32768]{0}', space=vmem, size = 0x8000, scoped, tag = 'input window, operand 3, single buffered']
    #allocation8 [shape = 'u8[2048]{0}', space=vmem, size = 0x800, scoped, tag = 'output window, operand 0, single buffered']
    %10 = vsyncpa [#allocation3], 0
    %11 = vsyncpa [#allocation6], 0
    %12 = vsyncpa [#allocation4], 0
    // Predicated region
    $region2: #{tpu_custom_call.1} parent=1 // pred_check
      _
    $region3: #{tpu_custom_call.1} parent=1 // pred_check_branch
      %14 = sbr.rel (0) target = $region5
    $region4: #{tpu_custom_call.1} parent=1 // pred_region
      %s16 = ssub.s32 512, 512
      %17 = vsyncadd [#allocation3], %s16
      %s19 = sshll.u32 [#allocation2], 4
      %s20 = int_to_ptr.vmem [resolvable:$true] %s19
      %22 = dma.hbm_to_vmem [thread:$0]  %s0, 512, %s20, [#allocation3]
    $region5: #{tpu_custom_call.1} parent=1 // pred_fallthru
      _
    // Predicated region
    $region6: #{tpu_custom_call.1} parent=1 // pred_check
      _
    $region7: #{tpu_custom_call.1} parent=1 // pred_check_branch
      %24 = sbr.rel (0) target = $region9
    $region8: #{tpu_custom_call.1} parent=1 // pred_region
      %s26 = ssub.s32 4096, 4096
      %27 = vsyncadd [#allocation6], %s26
      %s28 = sshll.u32 [#allocation5], 4
      %s29 = int_to_ptr.vmem [resolvable:$true] %s28
      %34 = dma.hbm_to_vmem [thread:$0]  %s1, 4096, %s29, [#allocation6], 64, 64, 4
    $region9: #{tpu_custom_call.1} parent=1 // pred_fallthru
      _
    // Predicated region
    $region10: #{tpu_custom_call.1} parent=1 // pred_check
      _
    $region11: #{tpu_custom_call.1} parent=1 // pred_check_branch
      %36 = sbr.rel (0) target = $region13
    $region12: #{tpu_custom_call.1} parent=1 // pred_region
      _
    $region13: #{tpu_custom_call.1} parent=1 // pred_fallthru
      _
    // Predicated region
    $region14: #{tpu_custom_call.1} parent=1 // pred_check
      _
    $region15: #{tpu_custom_call.1} parent=1 // pred_check_branch
      %38 = sbr.rel (0) target = $region17
    $region16: #{tpu_custom_call.1} parent=1 // pred_region
      %s40 = ssub.s32 1024, 1024
      %41 = vsyncadd [#allocation6], %s40
      %s42 = sshll.u32 [#allocation7], 4
      %s43 = int_to_ptr.vmem [resolvable:$true] %s42
      %48 = dma.hbm_to_vmem [thread:$0]  %s3, 1024, %s43, [#allocation6], 64, 64, 4
    $region17: #{tpu_custom_call.1} parent=1 // pred_fallthru
      _
    // Predicated region
    $region18: #{tpu_custom_call.1} parent=1 // pred_check
      _
    $region19: #{tpu_custom_call.1} parent=1 // pred_check_branch
      %50 = sbr.rel (0) target = $region21
    $region20: #{tpu_custom_call.1} parent=1 // pred_region
      _
    $region21: #{tpu_custom_call.1} parent=1 // pred_fallthru
      _
    // Predicated region
    $region22: #{tpu_custom_call.1} parent=1 // pred_check
      _
    $region23: #{tpu_custom_call.1} parent=1 // pred_check_branch
      %52 = sbr.rel (0) target = $region25
    $region24: #{tpu_custom_call.1} parent=1 // pred_region
      %53 = dma.done [#allocation3], 512
    $region25: #{tpu_custom_call.1} parent=1 // pred_fallthru
      _
    // Predicated region
    $region26: #{tpu_custom_call.1} parent=1 // pred_check
      _
    $region27: #{tpu_custom_call.1} parent=1 // pred_check_branch
      %55 = sbr.rel (0) target = $region29
    $region28: #{tpu_custom_call.1} parent=1 // pred_region
      %56 = dma.done [#allocation6], 4096
    $region29: #{tpu_custom_call.1} parent=1 // pred_fallthru
      _
    // Predicated region
    $region30: #{tpu_custom_call.1} parent=1 // pred_check
      _
    $region31: #{tpu_custom_call.1} parent=1 // pred_check_branch
      %58 = sbr.rel (0) target = $region33
    $region32: #{tpu_custom_call.1} parent=1 // pred_region
      %59 = dma.done [#allocation6], 1024
    $region33: #{tpu_custom_call.1} parent=1 // pred_fallthru
      _
    %v61 = vld [vmem:[#allocation2] sm:$0xff]
    %v62 = vld [vmem:[#allocation2 + $0x8] sm:$0xff]
    %v63 = vld [vmem:[#allocation2 + $0x10] sm:$0xff]
    %v64 = vld [vmem:[#allocation2 + $0x18] sm:$0xff]
    %v65 = vpack.c.bf16 %v61, %v61
    %v66 = vpack.c.bf16 %v62, %v62
    %v67 = vpack.c.bf16 %v63, %v63
    %v68 = vpack.c.bf16 %v64, %v64
    %v69 = vld [vmem:[#allocation5] sm:$0xf]
    %v70 = vld [vmem:[#allocation5 + $0x4] sm:$0xf]
    %v71 = vld [vmem:[#allocation5 + $0x8] sm:$0xf]
    %v72 = vld [vmem:[#allocation5 + $0xc] sm:$0xf]
    %v73 = vld [vmem:[#allocation5 + $0x10] sm:$0xf]
    %v74 = vld [vmem:[#allocation5 + $0x14] sm:$0xf]
    %v75 = vld [vmem:[#allocation5 + $0x18] sm:$0xf]
    %v76 = vld [vmem:[#allocation5 + $0x1c] sm:$0xf]
    %v77 = vld [vmem:[#allocation5 + $0x20] sm:$0xf]
    %v78 = vld [vmem:[#allocation5 + $0x24] sm:$0xf]
    %v79 = vld [vmem:[#allocation5 + $0x28] sm:$0xf]
    %v80 = vld [vmem:[#allocation5 + $0x2c] sm:$0xf]
    %v81 = vld [vmem:[#allocation5 + $0x30] sm:$0xf]
    %v82 = vld [vmem:[#allocation5 + $0x34] sm:$0xf]
    %v83 = vld [vmem:[#allocation5 + $0x38] sm:$0xf]
    %v84 = vld [vmem:[#allocation5 + $0x3c] sm:$0xf]
    %v85 = vld [vmem:[#allocation5 + $0x40] sm:$0xf]
    %v86 = vld [vmem:[#allocation5 + $0x44] sm:$0xf]
    %v87 = vld [vmem:[#allocation5 + $0x48] sm:$0xf]
    %v88 = vld [vmem:[#allocation5 + $0x4c] sm:$0xf]
    %v89 = vld [vmem:[#allocation5 + $0x50] sm:$0xf]
    %v90 = vld [vmem:[#allocation5 + $0x54] sm:$0xf]
    %v91 = vld [vmem:[#allocation5 + $0x58] sm:$0xf]
    %v92 = vld [vmem:[#allocation5 + $0x5c] sm:$0xf]
    %v93 = vld [vmem:[#allocation5 + $0x60] sm:$0xf]
    %v94 = vld [vmem:[#allocation5 + $0x64] sm:$0xf]
    %v95 = vld [vmem:[#allocation5 + $0x68] sm:$0xf]
    %v96 = vld [vmem:[#allocation5 + $0x6c] sm:$0xf]
    %v97 = vld [vmem:[#allocation5 + $0x70] sm:$0xf]
    %v98 = vld [vmem:[#allocation5 + $0x74] sm:$0xf]
    %v99 = vld [vmem:[#allocation5 + $0x78] sm:$0xf]
    %v100 = vld [vmem:[#allocation5 + $0x7c] sm:$0xf]
    %v101 = vld [vmem:[#allocation5 + $0x80] sm:$0xf]
    %v102 = vld [vmem:[#allocation5 + $0x84] sm:$0xf]
    %v103 = vld [vmem:[#allocation5 + $0x88] sm:$0xf]
    %v104 = vld [vmem:[#allocation5 + $0x8c] sm:$0xf]
    %v105 = vld [vmem:[#allocation5 + $0x90] sm:$0xf]
    %v106 = vld [vmem:[#allocation5 + $0x94] sm:$0xf]
    %v107 = vld [vmem:[#allocation5 + $0x98] sm:$0xf]
    %v108 = vld [vmem:[#allocation5 + $0x9c] sm:$0xf]
    %v109 = vld [vmem:[#allocation5 + $0xa0] sm:$0xf]
    %v110 = vld [vmem:[#allocation5 + $0xa4] sm:$0xf]
    %v111 = vld [vmem:[#allocation5 + $0xa8] sm:$0xf]
    %v112 = vld [vmem:[#allocation5 + $0xac] sm:$0xf]
    %v113 = vld [vmem:[#allocation5 + $0xb0] sm:$0xf]
    %v114 = vld [vmem:[#allocation5 + $0xb4] sm:$0xf]
    %v115 = vld [vmem:[#allocation5 + $0xb8] sm:$0xf]
    %v116 = vld [vmem:[#allocation5 + $0xbc] sm:$0xf]
    %v117 = vld [vmem:[#allocation5 + $0xc0] sm:$0xf]
    %v118 = vld [vmem:[#allocation5 + $0xc4] sm:$0xf]
    %v119 = vld [vmem:[#allocation5 + $0xc8] sm:$0xf]
    %v120 = vld [vmem:[#allocation5 + $0xcc] sm:$0xf]
    %v121 = vld [vmem:[#allocation5 + $0xd0] sm:$0xf]
    %v122 = vld [vmem:[#allocation5 + $0xd4] sm:$0xf]
    %v123 = vld [vmem:[#allocation5 + $0xd8] sm:$0xf]
    %v124 = vld [vmem:[#allocation5 + $0xdc] sm:$0xf]
    %v125 = vld [vmem:[#allocation5 + $0xe0] sm:$0xf]
    %v126 = vld [vmem:[#allocation5 + $0xe4] sm:$0xf]
    %v127 = vld [vmem:[#allocation5 + $0xe8] sm:$0xf]
    %v128 = vld [vmem:[#allocation5 + $0xec] sm:$0xf]
    %v129 = vld [vmem:[#allocation5 + $0xf0] sm:$0xf]
    %v130 = vld [vmem:[#allocation5 + $0xf4] sm:$0xf]
    %v131 = vld [vmem:[#allocation5 + $0xf8] sm:$0xf]
    %v132 = vld [vmem:[#allocation5 + $0xfc] sm:$0xf]
    %v133 = vld [vmem:[%s2] sm:$0x1]
    %v135 = vlaneseq
    %v136 = vshrl.u32 %v135, 7
    %v137 = vsub.s32 0, %v136
    %v138 = vrot.slane %v133, %v137
    %v204 = vunpack.c.l.b16 %v69
    %v205 = vunpack.c.l.b16 %v70
    %v206 = vunpack.c.l.b16 %v71
    %v207 = vunpack.c.l.b16 %v72
    %v208 = vunpack.c.l.b16 %v73
    %v209 = vunpack.c.l.b16 %v74
    %v210 = vunpack.c.l.b16 %v75
    %v211 = vunpack.c.l.b16 %v76
    %v212 = vunpack.c.l.b16 %v77
    %v213 = vunpack.c.l.b16 %v78
    %v214 = vunpack.c.l.b16 %v79
    %v215 = vunpack.c.l.b16 %v80
    %v216 = vunpack.c.l.b16 %v81
    %v217 = vunpack.c.l.b16 %v82
    %v218 = vunpack.c.l.b16 %v83
    %v219 = vunpack.c.l.b16 %v84
    %v220 = vunpack.c.l.b16 %v85
    %v221 = vunpack.c.l.b16 %v86
    %v222 = vunpack.c.l.b16 %v87
    %v223 = vunpack.c.l.b16 %v88
    %v224 = vunpack.c.l.b16 %v89
    %v225 = vunpack.c.l.b16 %v90
    %v226 = vunpack.c.l.b16 %v91
    %v227 = vunpack.c.l.b16 %v92
    %v228 = vunpack.c.l.b16 %v93
    %v229 = vunpack.c.l.b16 %v94
    %v230 = vunpack.c.l.b16 %v95
    %v231 = vunpack.c.l.b16 %v96
    %v232 = vunpack.c.l.b16 %v97
    %v233 = vunpack.c.l.b16 %v98
    %v234 = vunpack.c.l.b16 %v99
    %v235 = vunpack.c.l.b16 %v100
    %v236 = vunpack.c.l.b16 %v101
    %v237 = vunpack.c.l.b16 %v102
    %v238 = vunpack.c.l.b16 %v103
    %v239 = vunpack.c.l.b16 %v104
    %v240 = vunpack.c.l.b16 %v105
    %v241 = vunpack.c.l.b16 %v106
    %v242 = vunpack.c.l.b16 %v107
    %v243 = vunpack.c.l.b16 %v108
    %v244 = vunpack.c.l.b16 %v109
    %v245 = vunpack.c.l.b16 %v110
    %v246 = vunpack.c.l.b16 %v111
    %v247 = vunpack.c.l.b16 %v112
    %v248 = vunpack.c.l.b16 %v113
    %v249 = vunpack.c.l.b16 %v114
    %v250 = vunpack.c.l.b16 %v115
    %v251 = vunpack.c.l.b16 %v116
    %v252 = vunpack.c.l.b16 %v117
    %v253 = vunpack.c.l.b16 %v118
    %v254 = vunpack.c.l.b16 %v119
    %v255 = vunpack.c.l.b16 %v120
    %v256 = vunpack.c.l.b16 %v121
    %v257 = vunpack.c.l.b16 %v122
    %v258 = vunpack.c.l.b16 %v123
    %v259 = vunpack.c.l.b16 %v124
    %v260 = vunpack.c.l.b16 %v125
    %v261 = vunpack.c.l.b16 %v126
    %v262 = vunpack.c.l.b16 %v127
    %v263 = vunpack.c.l.b16 %v128
    %v264 = vunpack.c.l.b16 %v129
    %v265 = vunpack.c.l.b16 %v130
    %v266 = vunpack.c.l.b16 %v131
    %v267 = vunpack.c.l.b16 %v132
    %v268 = vpack.c.b16 %v205, %v204
    %v269 = vpack.c.b16 %v207, %v206
    %v270 = vpack.c.b16 %v209, %v208
    %v271 = vpack.c.b16 %v211, %v210
    %v272 = vpack.c.b16 %v213, %v212
    %v273 = vpack.c.b16 %v215, %v214
    %v274 = vpack.c.b16 %v217, %v216
    %v275 = vpack.c.b16 %v219, %v218
    %v276 = vpack.c.b16 %v221, %v220
    %v277 = vpack.c.b16 %v223, %v222
    %v278 = vpack.c.b16 %v225, %v224
    %v279 = vpack.c.b16 %v227, %v226
    %v280 = vpack.c.b16 %v229, %v228
    %v281 = vpack.c.b16 %v231, %v230
    %v282 = vpack.c.b16 %v233, %v232
    %v283 = vpack.c.b16 %v235, %v234
    %v284 = vpack.c.b16 %v237, %v236
    %v285 = vpack.c.b16 %v239, %v238
    %v286 = vpack.c.b16 %v241, %v240
    %v287 = vpack.c.b16 %v243, %v242
    %v288 = vpack.c.b16 %v245, %v244
    %v289 = vpack.c.b16 %v247, %v246
    %v290 = vpack.c.b16 %v249, %v248
    %v291 = vpack.c.b16 %v251, %v250
    %v292 = vpack.c.b16 %v253, %v252
    %v293 = vpack.c.b16 %v255, %v254
    %v294 = vpack.c.b16 %v257, %v256
    %v295 = vpack.c.b16 %v259, %v258
    %v296 = vpack.c.b16 %v261, %v260
    %v297 = vpack.c.b16 %v263, %v262
    %v298 = vpack.c.b16 %v265, %v264
    %v299 = vpack.c.b16 %v267, %v266
    %332 = vmatprep.subr.bf16.mxu0 0
    %333 = vmatpush1.bf16.msra.mxu0 %v268
    %334 = vmatprep.subr.bf16.mxu0 0
    %335 = vmatpush1.bf16.msra.mxu0 %v269
    %336 = vmatprep.subr.bf16.mxu0 0
    %337 = vmatpush1.bf16.msra.mxu0 %v270
    %338 = vmatprep.subr.bf16.mxu0 0
    %339 = vmatpush1.bf16.msra.mxu0 %v271
    %340 = vmatprep.subr.bf16.mxu0 0
    %341 = vmatpush1.bf16.msra.mxu0 %v272
    %342 = vmatprep.subr.bf16.mxu0 0
    %343 = vmatpush1.bf16.msra.mxu0 %v273
    %344 = vmatprep.subr.bf16.mxu0 0
    %345 = vmatpush1.bf16.msra.mxu0 %v274
    %346 = vmatprep.subr.bf16.mxu0 0
    %347 = vmatpush1.bf16.msra.mxu0 %v275
    %348 = vmatprep.subr.bf16.mxu0 0
    %349 = vmatpush1.bf16.msra.mxu0 %v276
    %350 = vmatprep.subr.bf16.mxu0 0
    %351 = vmatpush1.bf16.msra.mxu0 %v277
    %352 = vmatprep.subr.bf16.mxu0 0
    %353 = vmatpush1.bf16.msra.mxu0 %v278
    %354 = vmatprep.subr.bf16.mxu0 0
    %355 = vmatpush1.bf16.msra.mxu0 %v279
    %356 = vmatprep.subr.bf16.mxu0 0
    %357 = vmatpush1.bf16.msra.mxu0 %v280
    %358 = vmatprep.subr.bf16.mxu0 0
    %359 = vmatpush1.bf16.msra.mxu0 %v281
    %360 = vmatprep.subr.bf16.mxu0 0
    %361 = vmatpush1.bf16.msra.mxu0 %v282
    %362 = vmatprep.subr.bf16.mxu0 0
    %363 = vmatpush1.bf16.msra.mxu0 %v283
    %364 = vmatprep.mubr.bf16.mxu0 %v66
    %365 = vmatmul.mubr.bf16.gmra.mrb[0].mxu0 %v65
    %v366 = vpop.f32.mrb[0].mxu0
    %v367 = vadd.f32 %v138, %v366
    %v368 = vpop.f32.mrb[0].mxu0
    %v369 = vpop.f32.mrb[0].mxu0
    %v370 = vpop.f32.mrb[0].mxu0
    %371 = vdwg.mxu0
    %372 = vmatprep.subr.bf16.mxu0 0
    %373 = vmatpush1.bf16.msra.mxu0 %v284
    %374 = vmatprep.subr.bf16.mxu0 0
    %375 = vmatpush1.bf16.msra.mxu0 %v285
    %376 = vmatprep.subr.bf16.mxu0 0
    %377 = vmatpush1.bf16.msra.mxu0 %v286
    %378 = vmatprep.subr.bf16.mxu0 0
    %379 = vmatpush1.bf16.msra.mxu0 %v287
    %380 = vmatprep.subr.bf16.mxu0 0
    %381 = vmatpush1.bf16.msra.mxu0 %v288
    %382 = vmatprep.subr.bf16.mxu0 0
    %383 = vmatpush1.bf16.msra.mxu0 %v289
    %384 = vmatprep.subr.bf16.mxu0 0
    %385 = vmatpush1.bf16.msra.mxu0 %v290
    %386 = vmatprep.subr.bf16.mxu0 0
    %387 = vmatpush1.bf16.msra.mxu0 %v291
    %388 = vmatprep.subr.bf16.mxu0 0
    %389 = vmatpush1.bf16.msra.mxu0 %v292
    %390 = vmatprep.subr.bf16.mxu0 0
    %391 = vmatpush1.bf16.msra.mxu0 %v293
    %392 = vmatprep.subr.bf16.mxu0 0
    %393 = vmatpush1.bf16.msra.mxu0 %v294
    %394 = vmatprep.subr.bf16.mxu0 0
    %395 = vmatpush1.bf16.msra.mxu0 %v295
    %396 = vmatprep.subr.bf16.mxu0 0
    %397 = vmatpush1.bf16.msra.mxu0 %v296
    %398 = vmatprep.subr.bf16.mxu0 0
    %399 = vmatpush1.bf16.msra.mxu0 %v297
    %400 = vmatprep.subr.bf16.mxu0 0
    %401 = vmatpush1.bf16.msra.mxu0 %v298
    %402 = vmatprep.subr.bf16.mxu0 0
    %403 = vmatpush1.bf16.msra.mxu0 %v299
    %404 = vmatprep.mubr.bf16.mxu0 %v68
    %405 = vmatmul.mubr.bf16.gmra.mrb[0].mxu0 %v67
    %v406 = vpop.f32.mrb[0].mxu0
    %v407 = vadd.f32 %v367, %v406
    %v408 = vpop.f32.mrb[0].mxu0
    %v409 = vpop.f32.mrb[0].mxu0
    %v410 = vpop.f32.mrb[0].mxu0
    %411 = vdwg.mxu0
    %v412 = vxor.u32 %v407, 2147483648
    %v413 = vmul.f32 %v412, 1.442695
    %v414 = vpow.pop %v413
    %v415 = vadd.f32 %v414, 1.0
    %v416 = vrcp.pop %v415
    %v417 = vmul.f32 1.0, %v416
    %v418 = vmul.f32 %v407, %v417
    %v419 = vpack.c.bf16 %v418, %v418
    %v420 = vld [vmem:[#allocation7] sm:$0xf]
    %v421 = vld [vmem:[#allocation7 + $0x4] sm:$0xf]
    %v422 = vld [vmem:[#allocation7 + $0x8] sm:$0xf]
    %v423 = vld [vmem:[#allocation7 + $0xc] sm:$0xf]
    %v424 = vld [vmem:[#allocation7 + $0x10] sm:$0xf]
    %v425 = vld [vmem:[#allocation7 + $0x14] sm:$0xf]
    %v426 = vld [vmem:[#allocation7 + $0x18] sm:$0xf]
    %v427 = vld [vmem:[#allocation7 + $0x1c] sm:$0xf]
    %v428 = vld [vmem:[#allocation7 + $0x20] sm:$0xf]
    %v429 = vld [vmem:[#allocation7 + $0x24] sm:$0xf]
    %v430 = vld [vmem:[#allocation7 + $0x28] sm:$0xf]
    %v431 = vld [vmem:[#allocation7 + $0x2c] sm:$0xf]
    %v432 = vld [vmem:[#allocation7 + $0x30] sm:$0xf]
    %v433 = vld [vmem:[#allocation7 + $0x34] sm:$0xf]
    %v434 = vld [vmem:[#allocation7 + $0x38] sm:$0xf]
    %v435 = vld [vmem:[#allocation7 + $0x3c] sm:$0xf]
    %v436 = vld [vmem:[%s4] sm:$0x1]
    %v438 = vlaneseq
    %v439 = vshrl.u32 %v438, 7
    %v440 = vsub.s32 0, %v439
    %v441 = vrot.slane %v436, %v440
    %v459 = vunpack.c.l.b16 %v420
    %v460 = vunpack.c.l.b16 %v421
    %v461 = vunpack.c.l.b16 %v422
    %v462 = vunpack.c.l.b16 %v423
    %v463 = vunpack.c.l.b16 %v424
    %v464 = vunpack.c.l.b16 %v425
    %v465 = vunpack.c.l.b16 %v426
    %v466 = vunpack.c.l.b16 %v427
    %v467 = vunpack.c.l.b16 %v428
    %v468 = vunpack.c.l.b16 %v429
    %v469 = vunpack.c.l.b16 %v430
    %v470 = vunpack.c.l.b16 %v431
    %v471 = vunpack.c.l.b16 %v432
    %v472 = vunpack.c.l.b16 %v433
    %v473 = vunpack.c.l.b16 %v434
    %v474 = vunpack.c.l.b16 %v435
    %v475 = vpack.c.b16 %v460, %v459
    %v476 = vpack.c.b16 %v462, %v461
    %v477 = vpack.c.b16 %v464, %v463
    %v478 = vpack.c.b16 %v466, %v465
    %v479 = vpack.c.b16 %v468, %v467
    %v480 = vpack.c.b16 %v470, %v469
    %v481 = vpack.c.b16 %v472, %v471
    %v482 = vpack.c.b16 %v474, %v473
    %491 = vmatprep.subr.bf16.mxu0 0
    %492 = vmatpush1.bf16.msra.mxu0 %v475
    %493 = vmatprep.subr.bf16.mxu0 0
    %494 = vmatpush1.bf16.msra.mxu0 %v476
    %495 = vmatprep.subr.bf16.mxu0 0
    %496 = vmatpush1.bf16.msra.mxu0 %v477
    %497 = vmatprep.subr.bf16.mxu0 0
    %498 = vmatpush1.bf16.msra.mxu0 %v478
    %499 = vmatprep.subr.bf16.mxu0 0
    %500 = vmatpush1.bf16.msra.mxu0 %v479
    %501 = vmatprep.subr.bf16.mxu0 0
    %502 = vmatpush1.bf16.msra.mxu0 %v480
    %503 = vmatprep.subr.bf16.mxu0 0
    %504 = vmatpush1.bf16.msra.mxu0 %v481
    %505 = vmatprep.subr.bf16.mxu0 0
    %506 = vmatpush1.bf16.msra.mxu0 %v482
    %507 = vmatprep.subr.bf16.mxu0 0
    %508 = vmatpush1.bf16.msra.mxu0 0
    %509 = vmatprep.subr.bf16.mxu0 0
    %510 = vmatpush1.bf16.msra.mxu0 0
    %511 = vmatprep.subr.bf16.mxu0 0
    %512 = vmatpush1.bf16.msra.mxu0 0
    %513 = vmatprep.subr.bf16.mxu0 0
    %514 = vmatpush1.bf16.msra.mxu0 0
    %515 = vmatprep.subr.bf16.mxu0 0
    %516 = vmatpush1.bf16.msra.mxu0 0
    %517 = vmatprep.subr.bf16.mxu0 0
    %518 = vmatpush1.bf16.msra.mxu0 0
    %519 = vmatprep.subr.bf16.mxu0 0
    %520 = vmatpush1.bf16.msra.mxu0 0
    %521 = vmatprep.subr.bf16.mxu0 0
    %522 = vmatpush1.bf16.msra.mxu0 0
    %523 = vmatprep.mubr.bf16.mxu0 0
    %524 = vmatmul.mubr.bf16.gmra.mrb[0].mxu0 %v419
    %v525 = vpop.f32.mrb[0].mxu0
    %v526 = vadd.f32 %v441, %v525
    %v527 = vpop.f32.mrb[0].mxu0
    %v528 = vpop.f32.mrb[0].mxu0
    %v529 = vpop.f32.mrb[0].mxu0
    %530 = vdwg.mxu0
    %v531 = vmul.f32 %v526, 0.01
    %v532 = vpack.c.bf16 %v531, %v531
    %533 = vst [vmem:[#allocation8] sm:$0xf] %v532
    // Predicated region
    $region34: #{tpu_custom_call.1} parent=1 // pred_check
      _
    $region35: #{tpu_custom_call.1} parent=1 // pred_check_branch
      %535 = sbr.rel (0) target = $region37
    $region36: #{tpu_custom_call.1} parent=1 // pred_region
      %s537 = ssub.s32 64, 64
      %538 = vsyncadd [#allocation4], %s537
      %s540 = sshll.u32 [#allocation8], 4
      %s541 = int_to_ptr.vmem [resolvable:$true] %s540
      %543 = dma.vmem_to_hbm [thread:$0]  %s541, 64, %s5, [#allocation4]
    $region37: #{tpu_custom_call.1} parent=1 // pred_fallthru
      _
    // Predicated region
    $region38: #{tpu_custom_call.1} parent=1 // pred_check
      _
    $region39: #{tpu_custom_call.1} parent=1 // pred_check_branch
      %545 = sbr.rel (0) target = $region41
    $region40: #{tpu_custom_call.1} parent=1 // pred_region
      %546 = dma.done [#allocation4], 64
    $region41: #{tpu_custom_call.1} parent=1 // pred_fallthru
      _
    %547 = vsyncpa [#allocation3], 1
    %548 = vsyncpa [#allocation6], 1
    %549 = vsyncpa [#allocation4], 1

</llo_original>
